<compile_context>
chip_gen: v7x
topology: tpu7x:2x2x1
jax: 0.10.0
libtpu: 0.0.40
codegen_flags: <defaults>
</compile_context>

<pallas_src>
import jax
import jax.numpy as jnp
from jax.experimental import pallas as pl
from jax.experimental.pallas import tpu as pltpu


def _round_up(x, m):
    return ((x + m - 1) // m) * m


def _mlp_kernel(x_ref, w1_ref, b1_ref, w2_ref, b2_ref, o_ref):
    # Fused Linear -> ReLU -> Linear -> Sigmoid on one batch tile.
    # MXU accumulates in f32 regardless of operand dtype.
    h = jnp.dot(x_ref[...], w1_ref[...], preferred_element_type=jnp.float32)
    h = jnp.maximum(h + b1_ref[...].astype(jnp.float32), 0.0)          # bias + ReLU
    y = jnp.dot(h.astype(w2_ref.dtype), w2_ref[...],
                preferred_element_type=jnp.float32)
    y = y + b2_ref[...].astype(jnp.float32)
    o_ref[...] = jax.nn.sigmoid(y).astype(o_ref.dtype)                 # Sigmoid


def prepare_params(w1, b1, w2, b2):
    """One-time conversion from PyTorch nn.Linear layout
       (w1: [inter, in], b1: [inter], w2: [out, inter], b2: [out])
       to kernel layout: transposed [in, out], with only the HIDDEN dim
       zero-padded to a multiple of 128 (lane-dense).  The output feature
       dim is left unpadded — the kernel writes (B, out_size) directly."""
    inter, in_size = w1.shape
    out_size = w2.shape[0]
    inter_pad = _round_up(inter, 128)

    w1_t = jnp.zeros((in_size, inter_pad), w1.dtype).at[:, :inter].set(w1.T)
    b1_p = jnp.zeros((1, inter_pad), b1.dtype).at[0, :inter].set(b1)
    w2_t = jnp.zeros((inter_pad, out_size), w2.dtype).at[:inter, :].set(w2.T)
    b2_p = b2.reshape(1, out_size)
    return (w1_t, b1_p, w2_t, b2_p)


def next_state_depth_prediction(x, params, *, block_rows=8192):
    """x: [B, in_size]; params: output of prepare_params()."""
    w1p, b1p, w2p, b2p = params
    B, in_size = x.shape
    inter_pad = w1p.shape[1]
    out_size = w2p.shape[1]

    # Large tiles to amortize ~0.35us/step grid overhead, but keep >=2 grid
    # steps when B allows so v7x can shard the batch across its 2 TensorCores.
    half_b = _round_up(pl.cdiv(B, 2), 8)
    tm = max(8, min(block_rows, half_b))
    grid = (pl.cdiv(B, tm),)

    itemsize = jnp.dtype(x.dtype).itemsize
    cost = pl.CostEstimate(
        flops=2 * B * (in_size * inter_pad + inter_pad * out_size),
        transcendentals=B * out_size,                       # sigmoid
        bytes_accessed=B * (in_size + out_size) * itemsize,  # weights are tiny
    )

    return pl.pallas_call(
        _mlp_kernel,
        out_shape=jax.ShapeDtypeStruct((B, out_size), x.dtype),
        grid=grid,
        in_specs=[
            # batch tile of activations (pipelined / double-buffered)
            pl.BlockSpec((tm, in_size), lambda i: (i, 0)),
            # weights & biases: constant block index -> resident, DMA'd once
            pl.BlockSpec((in_size, inter_pad), lambda i: (0, 0)),
            pl.BlockSpec((1, inter_pad), lambda i: (0, 0)),
            pl.BlockSpec((inter_pad, out_size), lambda i: (0, 0)),
            pl.BlockSpec((1, out_size), lambda i: (0, 0)),
        ],
        # Last dim equals the full array dim (out_size) -> legal, no padding,
        # no wrapper slice needed.
        out_specs=pl.BlockSpec((tm, out_size), lambda i: (i, 0)),
        compiler_params=pltpu.CompilerParams(
            dimension_semantics=("parallel",),   # batch tiles independent (v7x: 2 TCs)
        ),
        cost_estimate=cost,
    )(x, w1p, b1p, w2p, b2p)


def _init_linear(key, fan_out, fan_in):
    # Deterministic init matching torch.nn.Linear default: U(-1/sqrt(fan_in), 1/sqrt(fan_in))
    kw, kb = jax.random.split(key)
    bound = 1.0 / jnp.sqrt(jnp.float32(fan_in))
    w = jax.random.uniform(kw, (fan_out, fan_in), jnp.float32, -bound, bound)
    b = jax.random.uniform(kb, (fan_out,), jnp.float32, -bound, bound)
    return w, b


if __name__ == "__main__":
    key = jax.random.PRNGKey(0)
    k_x, k_l1, k_l2 = jax.random.split(key, 3)

    batch = 64
    in_size = 32
    inter = in_size // 2          # 16
    out_size = 8

    x = jax.random.normal(k_x, (batch, in_size), jnp.float32)
    w1, b1 = _init_linear(k_l1, inter, in_size)
    w2, b2 = _init_linear(k_l2, out_size, inter)

    # One-time param prep (transpose + hidden-dim lane-pad); off the per-call path.
    params = prepare_params(w1, b1, w2, b2)

    # Default block_rows; at B=64 the tm clamp gives tm=32 -> grid=(2,),
    # exercising the multi-step (megacore-shardable) path.
    out = next_state_depth_prediction(x, params)
    out = jax.block_until_ready(out)

    # Pure-JAX reference check (matches the PyTorch forward).
    h_ref = jnp.maximum(x @ w1.T + b1, 0.0)
    y_ref = jax.nn.sigmoid(h_ref @ w2.T + b2)
    assert out.shape == (batch, out_size)
    assert jnp.allclose(out, y_ref, atol=1e-5, rtol=1e-5)

    print("KERNEL_OK")
</pallas_src>

<mosaic_0001>
module attributes {stable_mosaic.version = 11 : i64} {
  func.func @_mlp_kernel(%arg0: i32, %arg1: memref<32x32xf32, #tpu.memory_space<vmem>>, %arg2: memref<32x128xf32, #tpu.memory_space<vmem>>, %arg3: memref<1x128xf32, #tpu.memory_space<vmem>>, %arg4: memref<128x8xf32, #tpu.memory_space<vmem>>, %arg5: memref<1x8xf32, #tpu.memory_space<vmem>>, %arg6: memref<32x8xf32, #tpu.memory_space<vmem>>) attributes {dimension_semantics = [#tpu.dimension_semantics<parallel>], iteration_bounds = array<i64: 2>, scalar_prefetch = 0 : i64, scratch_operands = 0 : i64, tpu.core_type = #tpu.core_type<tc>, window_params = [{transform_indices = @transform_0, window_bounds = array<i64: 32, 32>}, {pipeline_mode = #tpu.pipeline_mode<synchronous>, transform_indices = @transform_1, window_bounds = array<i64: 32, 128>}, {pipeline_mode = #tpu.pipeline_mode<synchronous>, transform_indices = @transform_2, window_bounds = array<i64: 1, 128>}, {pipeline_mode = #tpu.pipeline_mode<synchronous>, transform_indices = @transform_3, window_bounds = array<i64: 128, 8>}, {pipeline_mode = #tpu.pipeline_mode<synchronous>, transform_indices = @transform_4, window_bounds = array<i64: 1, 8>}, {transform_indices = @transform_5, window_bounds = array<i64: 32, 8>}]} {
    %c0 = arith.constant 0 : index
    %c0_0 = arith.constant 0 : index
    %0 = vector.load %arg1[%c0, %c0_0] : memref<32x32xf32, #tpu.memory_space<vmem>>, vector<32x32xf32>
    %c0_1 = arith.constant 0 : index
    %c0_2 = arith.constant 0 : index
    %1 = vector.load %arg2[%c0_1, %c0_2] : memref<32x128xf32, #tpu.memory_space<vmem>>, vector<32x128xf32>
    %cst = arith.constant dense<0.000000e+00> : vector<32x128xf32>
    %2 = tpu.matmul %0, %1, %cst {dimension_numbers = #tpu.dot_dimension_numbers<[1], [0], [0], [1], [0, 0, 1, 1], [], []>} : vector<32x32xf32>, vector<32x128xf32>, vector<32x128xf32> -> vector<32x128xf32>
    %c0_3 = arith.constant 0 : index
    %c0_4 = arith.constant 0 : index
    %3 = vector.load %arg3[%c0_3, %c0_4] : memref<1x128xf32, #tpu.memory_space<vmem>>, vector<1x128xf32>
    %4 = vector.broadcast %3 : vector<1x128xf32> to vector<32x128xf32>
    %5 = arith.addf %2, %4 : vector<32x128xf32>
    %cst_5 = arith.constant 0.000000e+00 : f32
    %6 = vector.broadcast %cst_5 : f32 to vector<32x128xf32>
    %7 = arith.maximumf %5, %6 : vector<32x128xf32>
    %c0_6 = arith.constant 0 : index
    %c0_7 = arith.constant 0 : index
    %8 = vector.load %arg4[%c0_6, %c0_7] : memref<128x8xf32, #tpu.memory_space<vmem>>, vector<128x8xf32>
    %cst_8 = arith.constant dense<0.000000e+00> : vector<32x8xf32>
    %9 = tpu.matmul %7, %8, %cst_8 {dimension_numbers = #tpu.dot_dimension_numbers<[1], [0], [0], [1], [0, 0, 1, 1], [], []>} : vector<32x128xf32>, vector<128x8xf32>, vector<32x8xf32> -> vector<32x8xf32>
    %c0_9 = arith.constant 0 : index
    %c0_10 = arith.constant 0 : index
    %10 = vector.load %arg5[%c0_9, %c0_10] : memref<1x8xf32, #tpu.memory_space<vmem>>, vector<1x8xf32>
    %11 = vector.broadcast %10 : vector<1x8xf32> to vector<32x8xf32>
    %12 = arith.addf %9, %11 : vector<32x8xf32>
    %13 = arith.negf %12 : vector<32x8xf32>
    %14 = math.exp %13 : vector<32x8xf32>
    %cst_11 = arith.constant 1.000000e+00 : f32
    %15 = vector.broadcast %cst_11 : f32 to vector<32x8xf32>
    %16 = arith.addf %15, %14 : vector<32x8xf32>
    %17 = arith.divf %15, %16 : vector<32x8xf32>
    %c0_12 = arith.constant 0 : index
    %c0_13 = arith.constant 0 : index
    %18 = vector.load %arg6[%c0_12, %c0_13] : memref<32x8xf32, #tpu.memory_space<vmem>>, vector<32x8xf32>
    tpu.vector_store %arg6[%c0_12, %c0_13], %17 {strides = array<i32>} : memref<32x8xf32, #tpu.memory_space<vmem>>, vector<32x8xf32>,
    return
  }
  func.func @transform_0(%arg0: i32) -> (i32, i32) {
    %c0_i32 = arith.constant 0 : i32
    %c0_i32_0 = arith.constant 0 : i32
    return %arg0, %c0_i32 : i32, i32
  }
  func.func @transform_1(%arg0: i32) -> (i32, i32) {
    %c0_i32 = arith.constant 0 : i32
    %c0_i32_0 = arith.constant 0 : i32
    %c0_i32_1 = arith.constant 0 : i32
    return %c0_i32, %c0_i32_0 : i32, i32
  }
  func.func @transform_2(%arg0: i32) -> (i32, i32) {
    %c0_i32 = arith.constant 0 : i32
    %c0_i32_0 = arith.constant 0 : i32
    %c0_i32_1 = arith.constant 0 : i32
    return %c0_i32, %c0_i32_0 : i32, i32
  }
  func.func @transform_3(%arg0: i32) -> (i32, i32) {
    %c0_i32 = arith.constant 0 : i32
    %c0_i32_0 = arith.constant 0 : i32
    %c0_i32_1 = arith.constant 0 : i32
    return %c0_i32, %c0_i32_0 : i32, i32
  }
  func.func @transform_4(%arg0: i32) -> (i32, i32) {
    %c0_i32 = arith.constant 0 : i32
    %c0_i32_0 = arith.constant 0 : i32
    %c0_i32_1 = arith.constant 0 : i32
    return %c0_i32, %c0_i32_0 : i32, i32
  }
  func.func @transform_5(%arg0: i32) -> (i32, i32) {
    %c0_i32 = arith.constant 0 : i32
    %c0_i32_0 = arith.constant 0 : i32
    return %arg0, %c0_i32 : i32, i32
  }
}

</mosaic_0001>

<llo_original>
// kernel: tpu_custom_call.1
$region0: #{tpu_custom_call.1}
  #allocation0 [shape = 'u32[]', space=smem, size = 0x4, offset = 0x4, fixed_abs, tag = 'smem constant byte address 0x4 - core index']
  #allocation1 [shape = 'u32[144,128]{1,0:T(1,128)}', space=vmem, size = 0x12000, scoped, tag = 'internal scratch']
  %s0 = inlined_call_operand.vmem [shape: f32[64,32], index: 0, kind: input, shape index: {}]
  %s1 = inlined_call_operand.vmem [shape: f32[32,128], index: 1, kind: input, shape index: {}]
  %s2 = inlined_call_operand.vmem [shape: f32[1,128], index: 2, kind: input, shape index: {}]
  %s3 = inlined_call_operand.vmem [shape: f32[128,8], index: 3, kind: input, shape index: {}]
  %s4 = inlined_call_operand.vmem [shape: f32[1,8], index: 4, kind: input, shape index: {}]
  %s5 = inlined_call_operand.vmem [shape: f32[64,8], index: 5, kind: output, shape index: {}]
  %s6 = sld [smem:[#allocation0]]
  $region53: #{tpu_custom_call.1} parent=0
    _
  %s8 = ssub.s32 1, %s6
  %s9 = scalar_select 0, %s8, %s6
  loop: start=0, step=1, limit=4
  $region2: #{tpu_custom_call.1} parent=0 // loop_pre_header
    _
  $region3: #{tpu_custom_call.1} parent=0 // loop_header
    %s11 = sphi 0, %s15
    %p12 = scmp.ge.s32.totalorder %s11, 4
    %s21 = sphi 0, %s23
    %s24 = sphi 0, %s21
    %s25 = sphi 0, %s24
    %s41 = sphi 0, %s25
    %s45 = sphi 0, %s45
    %s47 = sphi 0, %s45
    %s48 = sphi 0, %s47
    %s62 = sphi 0, %s48
    %s66 = sphi 0, %s66
    %s68 = sphi 0, %s66
    %s69 = sphi 0, %s68
    %s83 = sphi 0, %s69
    %s87 = sphi 0, %s87
    %s89 = sphi 0, %s87
    %s90 = sphi 0, %s89
    %s104 = sphi 0, %s90
    %s108 = sphi 0, %s108
    %s110 = sphi 0, %s108
    %s111 = sphi 0, %s110
    %s125 = sphi 0, %s111
    %s131 = sphi 0, %s133
    %s134 = sphi 0, %s131
    %s135 = sphi 0, %s134
    %s151 = sphi 0, %s135
  $region4: #{tpu_custom_call.1} parent=0 // loop_header_branch
    %14 = sbr.rel (%p12) target = $region8
  $region5: #{tpu_custom_call.1} parent=0 // loop_body
    %s16 = ssub.s32 %s11, 1
    %s17 = ssub.s32 %s11, 2
    %s18 = sadd.s32 %s11, 1
    %s19 = ssub.s32 %s11, %s18
    %p20 = scmp.eq.s32.totalorder %s19, 0
    %s22 = sadd.s32 %s21, 1
    %s23 = scalar_select %p20, %s21, %s22
    %p26 = pneg %p20
    %p27 = scmp.eq.s32.totalorder %s11, 1
    %p28 = por %p26, %p27
    %p29 = scmp.ne.s32.totalorder %s21, %s24
    %p30 = scmp.eq.s32.totalorder %s11, 0
    %p31 = por %p29, %p30
    %p32 = scmp.ne.s32.totalorder %s21, %s24
    %p33 = scmp.eq.s32.totalorder %s16, 1
    %p34 = por %p32, %p33
    %p35 = scmp.ne.s32.totalorder %s24, %s25
    %p36 = scmp.eq.s32.totalorder %s16, 0
    %p37 = por %p35, %p36
    %p38 = scmp.ne.s32.totalorder %s24, %s25
    %p39 = scmp.eq.s32.totalorder %s17, 1
    %p40 = por %p38, %p39
    %p42 = scmp.ne.s32.totalorder %s25, %s41
    %p43 = scmp.eq.s32.totalorder %s17, 0
    %p44 = por %p42, %p43
    %s46 = sadd.s32 %s45, 1
    %p49 = scmp.eq.s32.totalorder %s11, 1
    %p50 = scmp.ne.s32.totalorder %s45, %s47
    %p51 = scmp.eq.s32.totalorder %s11, 0
    %p52 = por %p50, %p51
    %p53 = scmp.ne.s32.totalorder %s45, %s47
    %p54 = scmp.eq.s32.totalorder %s16, 1
    %p55 = por %p53, %p54
    %p56 = scmp.ne.s32.totalorder %s47, %s48
    %p57 = scmp.eq.s32.totalorder %s16, 0
    %p58 = por %p56, %p57
    %p59 = scmp.ne.s32.totalorder %s47, %s48
    %p60 = scmp.eq.s32.totalorder %s17, 1
    %p61 = por %p59, %p60
    %p63 = scmp.ne.s32.totalorder %s48, %s62
    %p64 = scmp.eq.s32.totalorder %s17, 0
    %p65 = por %p63, %p64
    %s67 = sadd.s32 %s66, 1
    %p70 = scmp.eq.s32.totalorder %s11, 1
    %p71 = scmp.ne.s32.totalorder %s66, %s68
    %p72 = scmp.eq.s32.totalorder %s11, 0
    %p73 = por %p71, %p72
    %p74 = scmp.ne.s32.totalorder %s66, %s68
    %p75 = scmp.eq.s32.totalorder %s16, 1
    %p76 = por %p74, %p75
    %p77 = scmp.ne.s32.totalorder %s68, %s69
    %p78 = scmp.eq.s32.totalorder %s16, 0
    %p79 = por %p77, %p78
    %p80 = scmp.ne.s32.totalorder %s68, %s69
    %p81 = scmp.eq.s32.totalorder %s17, 1
    %p82 = por %p80, %p81
    %p84 = scmp.ne.s32.totalorder %s69, %s83
    %p85 = scmp.eq.s32.totalorder %s17, 0
    %p86 = por %p84, %p85
    %s88 = sadd.s32 %s87, 1
    %p91 = scmp.eq.s32.totalorder %s11, 1
    %p92 = scmp.ne.s32.totalorder %s87, %s89
    %p93 = scmp.eq.s32.totalorder %s11, 0
    %p94 = por %p92, %p93
    %p95 = scmp.ne.s32.totalorder %s87, %s89
    %p96 = scmp.eq.s32.totalorder %s16, 1
    %p97 = por %p95, %p96
    %p98 = scmp.ne.s32.totalorder %s89, %s90
    %p99 = scmp.eq.s32.totalorder %s16, 0
    %p100 = por %p98, %p99
    %p101 = scmp.ne.s32.totalorder %s89, %s90
    %p102 = scmp.eq.s32.totalorder %s17, 1
    %p103 = por %p101, %p102
    %p105 = scmp.ne.s32.totalorder %s90, %s104
    %p106 = scmp.eq.s32.totalorder %s17, 0
    %p107 = por %p105, %p106
    %s109 = sadd.s32 %s108, 1
    %p112 = scmp.eq.s32.totalorder %s11, 1
    %p113 = scmp.ne.s32.totalorder %s108, %s110
    %p114 = scmp.eq.s32.totalorder %s11, 0
    %p115 = por %p113, %p114
    %p116 = scmp.ne.s32.totalorder %s108, %s110
    %p117 = scmp.eq.s32.totalorder %s16, 1
    %p118 = por %p116, %p117
    %p119 = scmp.ne.s32.totalorder %s110, %s111
    %p120 = scmp.eq.s32.totalorder %s16, 0
    %p121 = por %p119, %p120
    %p122 = scmp.ne.s32.totalorder %s110, %s111
    %p123 = scmp.eq.s32.totalorder %s17, 1
    %p124 = por %p122, %p123
    %p126 = scmp.ne.s32.totalorder %s111, %s125
    %p127 = scmp.eq.s32.totalorder %s17, 0
    %p128 = por %p126, %p127
    %s129 = ssub.s32 %s11, %s18
    %p130 = scmp.eq.s32.totalorder %s129, 0
    %s132 = sadd.s32 %s131, 1
    %s133 = scalar_select %p130, %s131, %s132
    %p136 = pneg %p130
    %p137 = scmp.eq.s32.totalorder %s11, 1
    %p138 = por %p136, %p137
    %p139 = scmp.ne.s32.totalorder %s131, %s134
    %p140 = scmp.eq.s32.totalorder %s11, 0
    %p141 = por %p139, %p140
    %p142 = scmp.ne.s32.totalorder %s131, %s134
    %p143 = scmp.eq.s32.totalorder %s16, 1
    %p144 = por %p142, %p143
    %p145 = scmp.ne.s32.totalorder %s134, %s135
    %p146 = scmp.eq.s32.totalorder %s16, 0
    %p147 = por %p145, %p146
    %p148 = scmp.ne.s32.totalorder %s134, %s135
    %p149 = scmp.eq.s32.totalorder %s17, 1
    %p150 = por %p148, %p149
    %p152 = scmp.ne.s32.totalorder %s135, %s151
    %p153 = scmp.eq.s32.totalorder %s17, 0
    %p154 = por %p152, %p153
    %p155 = scmp.le.s32.totalorder 1, %s11
    %p156 = scmp.lt.s32.totalorder %s11, 3
    %p157 = pnand %p155, %p156
    %p158 = pneg %p157
    // Predicated region
    $region9: #{tpu_custom_call.1} parent=5 // pred_check
      _
    $region10: #{tpu_custom_call.1} parent=5 // pred_check_branch
      %160 = sbr.rel (%p157) target = $region12
    $region11: #{tpu_custom_call.1} parent=5 // pred_region
      %s161 = ssub.s32 %s11, 1
      // Predicated region
      $region13: #{tpu_custom_call.1} parent=11 // pred_check
        %p162 = pneg %p58
      $region14: #{tpu_custom_call.1} parent=11 // pred_check_branch
        %164 = sbr.rel (%p162) target = $region16
      $region15: #{tpu_custom_call.1} parent=11 // pred_region
        _
      $region16: #{tpu_custom_call.1} parent=11 // pred_fallthru
        _
      // Predicated region
      $region17: #{tpu_custom_call.1} parent=11 // pred_check
        %p165 = pneg %p79
      $region18: #{tpu_custom_call.1} parent=11 // pred_check_branch
        %167 = sbr.rel (%p165) target = $region20
      $region19: #{tpu_custom_call.1} parent=11 // pred_region
        _
      $region20: #{tpu_custom_call.1} parent=11 // pred_fallthru
        _
      // Predicated region
      $region21: #{tpu_custom_call.1} parent=11 // pred_check
        %p168 = pneg %p100
      $region22: #{tpu_custom_call.1} parent=11 // pred_check_branch
        %170 = sbr.rel (%p168) target = $region24
      $region23: #{tpu_custom_call.1} parent=11 // pred_region
        _
      $region24: #{tpu_custom_call.1} parent=11 // pred_fallthru
        _
      // Predicated region
      $region25: #{tpu_custom_call.1} parent=11 // pred_check
        %p171 = pneg %p121
      $region26: #{tpu_custom_call.1} parent=11 // pred_check_branch
        %173 = sbr.rel (%p171) target = $region28
      $region27: #{tpu_custom_call.1} parent=11 // pred_region
        _
      $region28: #{tpu_custom_call.1} parent=11 // pred_fallthru
        _
    $region12: #{tpu_custom_call.1} parent=5 // pred_fallthru
      _
    %p174 = scmp.lt.s32.totalorder %s11, 2
    // Predicated region
    $region29: #{tpu_custom_call.1} parent=5 // pred_check
      %p175 = pneg %p174
    $region30: #{tpu_custom_call.1} parent=5 // pred_check_branch
      %177 = sbr.rel (%p175) target = $region32
    $region31: #{tpu_custom_call.1} parent=5 // pred_region
      // Predicated region
      $region33: #{tpu_custom_call.1} parent=31 // pred_check
        %p178 = pneg %p31
      $region34: #{tpu_custom_call.1} parent=31 // pred_check_branch
        %180 = sbr.rel (%p178) target = $region36
      $region35: #{tpu_custom_call.1} parent=31 // pred_region
        %s181 = smul.u32 4, %s11
        %p182 = scmp.lt.s32.totalorder %s181, 7
        %s183 = scalar_select %p182, %s181, 7
        %s184 = smul.addr %s183, 8
        %s185 = scalar_lea.vmem %s0, %s184
        %s186 = smul.u32 4, %s11
      $region36: #{tpu_custom_call.1} parent=31 // pred_fallthru
        _
    $region32: #{tpu_custom_call.1} parent=5 // pred_fallthru
      _
    %p187 = scmp.le.s32.totalorder 1, %s11
    %p188 = scmp.lt.s32.totalorder %s11, 3
    %p189 = pnand %p187, %p188
    %p190 = pneg %p189
    // Predicated region
    $region37: #{tpu_custom_call.1} parent=5 // pred_check
      _
    $region38: #{tpu_custom_call.1} parent=5 // pred_check_branch
      %192 = sbr.rel (%p189) target = $region40
    $region39: #{tpu_custom_call.1} parent=5 // pred_region
      %s193 = ssub.s32 %s11, 1
      %s194 = smul.u32 4, %s16
      %p195 = scmp.lt.s32.totalorder %s194, 7
      %s196 = scalar_select %p195, %s194, 7
      %s197 = smul.addr %s196, 8
      %s198 = scalar_lea.vmem %s0, %s197
      %p199 = pneg %p37
      %p200 = pneg %p34
      %p201 = pneg %p58
      %p202 = pneg %p55
      %p203 = pneg %p79
      %p204 = pneg %p76
      %p205 = pneg %p100
      %p206 = pneg %p97
      %p207 = pneg %p121
      %p208 = pneg %p118
      %p209 = pneg %p147
      %p210 = pneg %p144
      %s211 = smul.u32 4, %s16
      %p212 = scmp.lt.s32.totalorder %s211, 7
      %s213 = scalar_select %p212, %s211, 7
      %s214 = smul.addr %s213, 8
      %s215 = scalar_lea.vmem %s5, %s214
      %s216 = smul.u32 4, %s16
      %p217 = scmp.lt.s32.totalorder %s216, 7
      %s218 = scalar_select %p217, %s216, 7
      %s219 = smul.addr %s218, 8
      %s220 = scalar_lea.vmem %s0, %s219
      %s221 = smul.u32 4, %s16
      %s222 = smul.u32 4, %s16
      %p223 = scmp.lt.s32.totalorder %s222, 7
      %s224 = scalar_select %p223, %s222, 7
      %s225 = smul.addr %s224, 8
      %s226 = scalar_lea.vmem %s5, %s225
      %s227 = smul.u32 4, %s16
      %v228 = vld [vmem:[%s220] sm:$0xff]
      %v229 = vld [vmem:[%s220 + $0x8] sm:$0xff]
      %v230 = vld [vmem:[%s220 + $0x10] sm:$0xff]
      %v231 = vld [vmem:[%s220 + $0x18] sm:$0xff]
      %v232 = vld [vmem:[%s1] sm:$0xff]
      %v233 = vld [vmem:[%s1 + $0x8] sm:$0xff]
      %v234 = vld [vmem:[%s1 + $0x10] sm:$0xff]
      %v235 = vld [vmem:[%s1 + $0x18] sm:$0xff]
      %v236 = vld [vmem:[%s2] sm:$0x1]
      %v238 = vlaneseq
      %v239 = vshrl.u32 %v238, 7
      %v240 = vsub.s32 0, %v239
      %v241 = vrot.slane %v236, %v240
      %vm243 = vcmask 261120
      %v245 = vsel %vm243, %v228, 0
      %v248 = vsel %vm243, %v229, 0
      %v251 = vsel %vm243, %v230, 0
      %v254 = vsel %vm243, %v231, 0
      %256 = vmatprep.subr.mxu0 0.0
      %257 = vmatpush1.msra.mxu0 %v232
      %258 = vmatprep.subr.mxu0 0.0
      %259 = vmatpush1.msra.mxu0 %v233
      %260 = vmatprep.subr.mxu0 0.0
      %261 = vmatpush1.msra.mxu0 %v234
      %262 = vmatprep.subr.mxu0 0.0
      %263 = vmatpush1.msra.mxu0 %v235
      %264 = vmatprep.subr.mxu0 0.0
      %265 = vmatpush1.msra.mxu0 0.0
      %266 = vmatprep.subr.mxu0 0.0
      %267 = vmatpush1.msra.mxu0 0.0
      %268 = vmatprep.subr.mxu0 0.0
      %269 = vmatpush1.msra.mxu0 0.0
      %270 = vmatprep.subr.mxu0 0.0
      %271 = vmatpush1.msra.mxu0 0.0
      %272 = vmatprep.subr.mxu0 0.0
      %273 = vmatpush1.msra.mxu0 0.0
      %274 = vmatprep.subr.mxu0 0.0
      %275 = vmatpush1.msra.mxu0 0.0
      %276 = vmatprep.subr.mxu0 0.0
      %277 = vmatpush1.msra.mxu0 0.0
      %278 = vmatprep.subr.mxu0 0.0
      %279 = vmatpush1.msra.mxu0 0.0
      %280 = vmatprep.subr.mxu0 0.0
      %281 = vmatpush1.msra.mxu0 0.0
      %282 = vmatprep.subr.mxu0 0.0
      %283 = vmatpush1.msra.mxu0 0.0
      %284 = vmatprep.subr.mxu0 0.0
      %285 = vmatpush1.msra.mxu0 0.0
      %286 = vmatprep.subr.mxu0 0.0
      %287 = vmatpush1.msra.mxu0 0.0
      %288 = vmatprep.subr.mxu0 0.0
      %289 = vmatpush1.msra.mxu0 0.0
      %290 = vmatprep.subr.mxu0 0.0
      %291 = vmatpush1.msra.mxu0 0.0
      %292 = vmatprep.subr.mxu0 0.0
      %293 = vmatpush1.msra.mxu0 0.0
      %294 = vmatprep.subr.mxu0 0.0
      %295 = vmatpush1.msra.mxu0 0.0
      %296 = vmatprep.subr.mxu0 0.0
      %297 = vmatpush1.msra.mxu0 0.0
      %298 = vmatprep.subr.mxu0 0.0
      %299 = vmatpush1.msra.mxu0 0.0
      %300 = vmatprep.subr.mxu0 0.0
      %301 = vmatpush1.msra.mxu0 0.0
      %302 = vmatprep.subr.mxu0 0.0
      %303 = vmatpush1.msra.mxu0 0.0
      %304 = vmatprep.subr.mxu0 0.0
      %305 = vmatpush1.msra.mxu0 0.0
      %306 = vmatprep.subr.mxu0 0.0
      %307 = vmatpush1.msra.mxu0 0.0
      %308 = vmatprep.subr.mxu0 0.0
      %309 = vmatpush1.msra.mxu0 0.0
      %310 = vmatprep.subr.mxu0 0.0
      %311 = vmatpush1.msra.mxu0 0.0
      %312 = vmatprep.subr.mxu0 0.0
      %313 = vmatpush1.msra.mxu0 0.0
      %314 = vmatprep.subr.mxu0 0.0
      %315 = vmatpush1.msra.mxu0 0.0
      %316 = vmatprep.subr.mxu0 0.0
      %317 = vmatpush1.msra.mxu0 0.0
      %318 = vmatprep.subr.mxu0 0.0
      %319 = vmatpush1.msra.mxu0 0.0
      %320 = vmatprep.mubr.f32.mxu0 0.0
      %321 = vmatmul.mubr.f32.gmra.mrb[0].mxu0 %v245
      %v322 = vpop.f32.mrb[0].mxu0
      %v323 = vadd.f32 %v241, %v322
      %v324 = vpop.f32.mrb[0].mxu0
      %325 = vmatprep.mubr.f32.mxu0 0.0
      %326 = vmatmul.mubr.f32.gmra.mrb[0].mxu0 %v248
      %v327 = vpop.f32.mrb[0].mxu0
      %v328 = vadd.f32 %v241, %v327
      %v329 = vpop.f32.mrb[0].mxu0
      %330 = vmatprep.mubr.f32.mxu0 0.0
      %331 = vmatmul.mubr.f32.gmra.mrb[0].mxu0 %v251
      %v332 = vpop.f32.mrb[0].mxu0
      %v333 = vadd.f32 %v241, %v332
      %v334 = vpop.f32.mrb[0].mxu0
      %335 = vmatprep.mubr.f32.mxu0 0.0
      %336 = vmatmul.mubr.f32.gmra.mrb[0].mxu0 %v254
      %v337 = vpop.f32.mrb[0].mxu0
      %v338 = vadd.f32 %v241, %v337
      %v339 = vpop.f32.mrb[0].mxu0
      %340 = vdwg.mxu0
      %v341 = vmax.f32 %v323, 0.0
      %v342 = vmax.f32 %v328, 0.0
      %v343 = vmax.f32 %v333, 0.0
      %v344 = vmax.f32 %v338, 0.0
      %v345 = vld [vmem:[%s3] sm:$0xff]
      %v346 = vld [vmem:[%s3 + $0x8] sm:$0xff]
      %v347 = vld [vmem:[%s3 + $0x10] sm:$0xff]
      %v348 = vld [vmem:[%s3 + $0x18] sm:$0xff]
      %v349 = vld [vmem:[%s3 + $0x20] sm:$0xff]
      %v350 = vld [vmem:[%s3 + $0x28] sm:$0xff]
      %v351 = vld [vmem:[%s3 + $0x30] sm:$0xff]
      %v352 = vld [vmem:[%s3 + $0x38] sm:$0xff]
      %v353 = vld [vmem:[%s3 + $0x40] sm:$0xff]
      %v354 = vld [vmem:[%s3 + $0x48] sm:$0xff]
      %v355 = vld [vmem:[%s3 + $0x50] sm:$0xff]
      %v356 = vld [vmem:[%s3 + $0x58] sm:$0xff]
      %v357 = vld [vmem:[%s3 + $0x60] sm:$0xff]
      %v358 = vld [vmem:[%s3 + $0x68] sm:$0xff]
      %v359 = vld [vmem:[%s3 + $0x70] sm:$0xff]
      %v360 = vld [vmem:[%s3 + $0x78] sm:$0xff]
      %v361 = vld [vmem:[%s4] sm:$0x1]
      %v363 = vlaneseq
      %v364 = vshrl.u32 %v363, 7
      %v365 = vsub.s32 0, %v364
      %v366 = vrot.slane %v361, %v365
      %368 = vmatprep.subr.mxu0 0.0
      %369 = vmatpush1.msra.mxu0 %v345
      %370 = vmatprep.subr.mxu0 0.0
      %371 = vmatpush1.msra.mxu0 %v346
      %372 = vmatprep.subr.mxu0 0.0
      %373 = vmatpush1.msra.mxu0 %v347
      %374 = vmatprep.subr.mxu0 0.0
      %375 = vmatpush1.msra.mxu0 %v348
      %376 = vmatprep.subr.mxu0 0.0
      %377 = vmatpush1.msra.mxu0 %v349
      %378 = vmatprep.subr.mxu0 0.0
      %379 = vmatpush1.msra.mxu0 %v350
      %380 = vmatprep.subr.mxu0 0.0
      %381 = vmatpush1.msra.mxu0 %v351
      %382 = vmatprep.subr.mxu0 0.0
      %383 = vmatpush1.msra.mxu0 %v352
      %384 = vmatprep.subr.mxu0 0.0
      %385 = vmatpush1.msra.mxu0 %v353
      %386 = vmatprep.subr.mxu0 0.0
      %387 = vmatpush1.msra.mxu0 %v354
      %388 = vmatprep.subr.mxu0 0.0
      %389 = vmatpush1.msra.mxu0 %v355
      %390 = vmatprep.subr.mxu0 0.0
      %391 = vmatpush1.msra.mxu0 %v356
      %392 = vmatprep.subr.mxu0 0.0
      %393 = vmatpush1.msra.mxu0 %v357
      %394 = vmatprep.subr.mxu0 0.0
      %395 = vmatpush1.msra.mxu0 %v358
      %396 = vmatprep.subr.mxu0 0.0
      %397 = vmatpush1.msra.mxu0 %v359
      %398 = vmatprep.subr.mxu0 0.0
      %399 = vmatpush1.msra.mxu0 %v360
      %400 = vmatprep.subr.mxu0 0.0
      %401 = vmatpush1.msra.mxu0 0.0
      %402 = vmatprep.subr.mxu0 0.0
      %403 = vmatpush1.msra.mxu0 0.0
      %404 = vmatprep.subr.mxu0 0.0
      %405 = vmatpush1.msra.mxu0 0.0
      %406 = vmatprep.subr.mxu0 0.0
      %407 = vmatpush1.msra.mxu0 0.0
      %408 = vmatprep.subr.mxu0 0.0
      %409 = vmatpush1.msra.mxu0 0.0
      %410 = vmatprep.subr.mxu0 0.0
      %411 = vmatpush1.msra.mxu0 0.0
      %412 = vmatprep.subr.mxu0 0.0
      %413 = vmatpush1.msra.mxu0 0.0
      %414 = vmatprep.subr.mxu0 0.0
      %415 = vmatpush1.msra.mxu0 0.0
      %416 = vmatprep.subr.mxu0 0.0
      %417 = vmatpush1.msra.mxu0 0.0
      %418 = vmatprep.subr.mxu0 0.0
      %419 = vmatpush1.msra.mxu0 0.0
      %420 = vmatprep.subr.mxu0 0.0
      %421 = vmatpush1.msra.mxu0 0.0
      %422 = vmatprep.subr.mxu0 0.0
      %423 = vmatpush1.msra.mxu0 0.0
      %424 = vmatprep.subr.mxu0 0.0
      %425 = vmatpush1.msra.mxu0 0.0
      %426 = vmatprep.subr.mxu0 0.0
      %427 = vmatpush1.msra.mxu0 0.0
      %428 = vmatprep.subr.mxu0 0.0
      %429 = vmatpush1.msra.mxu0 0.0
      %430 = vmatprep.subr.mxu0 0.0
      %431 = vmatpush1.msra.mxu0 0.0
      %432 = vmatprep.mubr.f32.mxu0 0.0
      %433 = vmatmul.mubr.f32.gmra.mrb[0].mxu0 %v341
      %v434 = vpop.f32.mrb[0].mxu0
      %v435 = vadd.f32 %v366, %v434
      %v436 = vpop.f32.mrb[0].mxu0
      %437 = vmatprep.mubr.f32.mxu0 0.0
      %438 = vmatmul.mubr.f32.gmra.mrb[0].mxu0 %v342
      %v439 = vpop.f32.mrb[0].mxu0
      %v440 = vadd.f32 %v366, %v439
      %v441 = vpop.f32.mrb[0].mxu0
      %442 = vmatprep.mubr.f32.mxu0 0.0
      %443 = vmatmul.mubr.f32.gmra.mrb[0].mxu0 %v343
      %v444 = vpop.f32.mrb[0].mxu0
      %v445 = vadd.f32 %v366, %v444
      %v446 = vpop.f32.mrb[0].mxu0
      %447 = vmatprep.mubr.f32.mxu0 0.0
      %448 = vmatmul.mubr.f32.gmra.mrb[0].mxu0 %v344
      %v449 = vpop.f32.mrb[0].mxu0
      %v450 = vadd.f32 %v366, %v449
      %v451 = vpop.f32.mrb[0].mxu0
      %452 = vdwg.mxu0
      %v453 = vxor.u32 %v435, 2147483648
      %v454 = vxor.u32 %v440, 2147483648
      %v455 = vxor.u32 %v445, 2147483648
      %v456 = vxor.u32 %v450, 2147483648
      %v457 = vmul.f32 %v453, 1.442695
      %v458 = vpow.pop %v457
      %v459 = vmul.f32 %v454, 1.442695
      %v460 = vpow.pop %v459
      %v461 = vmul.f32 %v455, 1.442695
      %v462 = vpow.pop %v461
      %v463 = vmul.f32 %v456, 1.442695
      %v464 = vpow.pop %v463
      %v465 = vadd.f32 %v458, 1.0
      %v466 = vadd.f32 %v460, 1.0
      %v467 = vadd.f32 %v462, 1.0
      %v468 = vadd.f32 %v464, 1.0
      %v469 = vrcp.pop %v465
      %v470 = vmul.f32 1.0, %v469
      %v471 = vrcp.pop %v466
      %v472 = vmul.f32 1.0, %v471
      %v473 = vrcp.pop %v467
      %v474 = vmul.f32 1.0, %v473
      %v475 = vrcp.pop %v468
      %v476 = vmul.f32 1.0, %v475
      %vm477 = vcmask 64512
      %478 = vst.msk [vmem:[%s226] sm:$0xff] %vm477, %v470
      %479 = vst.msk [vmem:[%s226 + $0x8] sm:$0xff] %vm477, %v472
      %480 = vst.msk [vmem:[%s226 + $0x10] sm:$0xff] %vm477, %v474
      %481 = vst.msk [vmem:[%s226 + $0x18] sm:$0xff] %vm477, %v476
      %s482 = smul.u32 4, %s16
      %p483 = scmp.lt.s32.totalorder %s482, 7
      %s484 = scalar_select %p483, %s482, 7
      %s485 = smul.addr %s484, 8
      %s486 = scalar_lea.vmem %s5, %s485
      // Predicated region
      $region41: #{tpu_custom_call.1} parent=39 // pred_check
        %p487 = pneg %p144
      $region42: #{tpu_custom_call.1} parent=39 // pred_check_branch
        %489 = sbr.rel (%p487) target = $region44
      $region43: #{tpu_custom_call.1} parent=39 // pred_region
        %s490 = smul.u32 4, %s16
      $region44: #{tpu_custom_call.1} parent=39 // pred_fallthru
        _
    $region40: #{tpu_custom_call.1} parent=5 // pred_fallthru
      _
    %p491 = scmp.le.s32.totalorder 2, %s11
    // Predicated region
    $region45: #{tpu_custom_call.1} parent=5 // pred_check
      %p492 = pneg %p491
    $region46: #{tpu_custom_call.1} parent=5 // pred_check_branch
      %494 = sbr.rel (%p492) target = $region48
    $region47: #{tpu_custom_call.1} parent=5 // pred_region
      %s495 = ssub.s32 %s11, 2
      // Predicated region
      $region49: #{tpu_custom_call.1} parent=47 // pred_check
        %p496 = pneg %p150
      $region50: #{tpu_custom_call.1} parent=47 // pred_check_branch
        %498 = sbr.rel (%p496) target = $region52
      $region51: #{tpu_custom_call.1} parent=47 // pred_region
        %s499 = smul.u32 4, %s17
        %p500 = scmp.lt.s32.totalorder %s499, 7
        %s501 = scalar_select %p500, %s499, 7
        %s502 = smul.addr %s501, 8
        %s503 = scalar_lea.vmem %s5, %s502
      $region52: #{tpu_custom_call.1} parent=47 // pred_fallthru
        _
    $region48: #{tpu_custom_call.1} parent=5 // pred_fallthru
      _
  $region6: #{tpu_custom_call.1} parent=0 // loop_footer
    %s15 = sadd.s32 1, %s11
  $region7: #{tpu_custom_call.1} parent=0 // loop_footer_branch
    %10 = sbr.rel target = $region3
  $region8: #{tpu_custom_call.1} parent=0 // loop_exit
    _

</llo_original>
